<compile_context>
chip_gen: v5e
topology: v5e:2x2
jax: 0.10.0
libtpu: 0.0.40
codegen_flags: <defaults>
</compile_context>

<pallas_src>
import functools
import math

import jax
import jax.numpy as jnp
from jax.experimental import pallas as pl
from jax.experimental.pallas import tpu as pltpu

_LANE = 128
_SUBLANE = 8
# Inputs smaller than this (elements) skip the Pallas kernel: launch +
# pipeline priming dominates tiny feature maps; XLA's fused reduction wins.
_FAST_PATH_ELEMS = 1 << 15  # 32K elements (~128 KiB of f32)


@functools.lru_cache(maxsize=1)
def _chip_config():
    """Returns (num_slices, core_parallel, tile_rows) tuned per TPU generation."""
    try:
        kind = jax.devices()[0].device_kind.lower()
    except Exception:  # pragma: no cover - defensive
        kind = ""
    if "v7" in kind:
        # Two TensorCores per chip; CORE_PARALLEL is needed to engage both.
        return 2, True, 8192
    if "v4" in kind or "v5p" in kind:
        # Megacore: plain "parallel" shards the leading grid axis across cores.
        return 2, False, 4096
    if "v6" in kind:
        return 1, False, 8192  # 32 MiB default scoped VMEM
    if "v5" in kind:
        return 1, False, 4096  # v5e: 16 MiB default scoped VMEM
    return 1, False, 2048      # unknown / older chips: stay conservative


def _mse_partial_sums(x2d, t2d, *, tile_rows, num_slices, core_parallel):
    """Partial sums of (x - t)^2 over a lane-dense (rows, 128) slab.

    Returns a (num_slices, 1) f32 array of partial sums; the caller sums them
    and divides by the true element count.
    """
    rows, cols = x2d.shape
    assert cols == _LANE and rows >= _SUBLANE

    tile_rows = min(tile_rows, (rows // _SUBLANE) * _SUBLANE)
    nblocks = pl.cdiv(rows, tile_rows)
    num_slices = max(1, min(num_slices, nblocks))
    steps = pl.cdiv(nblocks, num_slices)

    exact_split = (num_slices * steps == nblocks)
    exact_tile = (nblocks * tile_rows == rows)
    needs_mask = (not exact_split) or (not exact_tile)
    full_blocks = rows // tile_rows  # blocks whose rows are all in range

    # Small fixed accumulator (<= 64 sublane rows) instead of a full-tile one.
    acc_rows = math.gcd(tile_rows, 64)

    if exact_split:
        def idx(c, i):
            return (c * steps + i, 0)
    else:
        def idx(c, i):
            # Phantom steps (only when nblocks % num_slices != 0) clamp onto
            # the last valid block so every DMA stays in bounds; their
            # contribution is zeroed by the boundary mask below.
            return (jnp.minimum(c * steps + i, nblocks - 1), 0)

    def kernel(x_ref, t_ref, out_ref, acc_ref):
        c = pl.program_id(0)
        i = pl.program_id(1)

        @pl.when(i == 0)
        def _():
            acc_ref[...] = jnp.zeros_like(acc_ref)

        d = x_ref[...].astype(jnp.float32) - t_ref[...].astype(jnp.float32)
        sq = d * d

        def accumulate(vals):
            acc_ref[...] += vals.reshape(-1, acc_rows, _LANE).sum(axis=0)

        if not needs_mask:
            accumulate(sq)
        else:
            blk = c * steps + i

            @pl.when(blk < full_blocks)        # steady state: no masking
            def _():
                accumulate(sq)

            @pl.when(blk >= full_blocks)       # boundary / phantom block
            def _():
                row_id = blk * tile_rows + jax.lax.broadcasted_iota(
                    jnp.int32, (tile_rows, 1), 0)
                # NOTE: keep this a select applied AFTER d*d so garbage
                # (possibly NaN/Inf) rows of a partial block are discarded,
                # never multiplied into the sum.
                accumulate(jnp.where(row_id < rows, sq, 0.0))

        @pl.when(i == pl.num_programs(1) - 1)
        def _():
            out_ref[0, 0] = jnp.sum(acc_ref[...])

    if num_slices > 1 and core_parallel:
        lead = getattr(pltpu, "CORE_PARALLEL", pltpu.PARALLEL)
    elif num_slices > 1:
        lead = pltpu.PARALLEL
    else:
        lead = pltpu.ARBITRARY

    bytes_accessed = (x2d.size * x2d.dtype.itemsize
                      + t2d.size * t2d.dtype.itemsize
                      + num_slices * 4)

    return pl.pallas_call(
        kernel,
        out_shape=jax.ShapeDtypeStruct((num_slices, 1), jnp.float32),
        grid_spec=pltpu.PrefetchScalarGridSpec(
            num_scalar_prefetch=0,
            grid=(num_slices, steps),
            in_specs=[
                pl.BlockSpec((tile_rows, cols), idx),
                pl.BlockSpec((tile_rows, cols), idx),
            ],
            out_specs=pl.BlockSpec(
                (1, 1), lambda c, i: (c, 0),
                memory_space=pltpu.MemorySpace.SMEM),
            scratch_shapes=[pltpu.VMEM((acc_rows, _LANE), jnp.float32)],
        ),
        compiler_params=pltpu.CompilerParams(
            dimension_semantics=(lead, pltpu.ARBITRARY)),
        cost_estimate=pl.CostEstimate(
            flops=3 * rows * cols,
            transcendentals=0,
            bytes_accessed=bytes_accessed),
    )(x2d, t2d)


def _split_flat(a):
    """Flatten `a` into a lane-dense 2-D bulk plus a tiny tail.

    Returns (main_2d, tail_1d). main_2d is (k, 128) covering the largest
    multiple-of-128 prefix (None if fewer than 128 elements); tail_1d is the
    <128-element remainder (None when the size is a multiple of 128).
    When n % 128 == 0 the bulk is a pure reshape of the contiguous input -
    no slice, no extra HBM copy feeding the kernel (the common case).
    """
    flat = a.reshape(-1)
    n = flat.shape[0]
    n_main = n - (n % _LANE)
    main = None
    if n_main:
        # Ragged case only: a <128-element sliver forces one prefix slice.
        bulk = flat if n_main == n else flat[:n_main]
        main = bulk.reshape(n_main // _LANE, _LANE)
    tail = None if n_main == n else flat[n_main:]
    return main, tail


class ContentLoss:
    """JAX/Pallas port of the PyTorch ContentLoss module.

    forward(x) computes MSE(x, target) into self.loss_value and returns x
    unchanged (pass-through).

    NOTE: self.loss_value is a plain Python attribute; under jax.jit it holds
    a tracer / only the last traced value (same caveat as the original module
    under torch.compile). Intended for eager use, matching the PyTorch spec.
    """

    def __init__(self, target, *, min_kernel_elems=_FAST_PATH_ELEMS):
        self.target = jax.lax.stop_gradient(target)   # .detach()
        self._min_kernel_elems = int(min_kernel_elems)
        self._num_slices, self._core_parallel, self._tile_rows = _chip_config()
        # Target is constant across forward calls: flatten/split once & cache.
        self._t_main, self._t_tail = _split_flat(self.target)
        self.loss_value = None

    def forward(self, x):
        assert x.shape == self.target.shape, "input/target shape mismatch"
        n_elem = x.size
        x_main, x_tail = _split_flat(x)

        use_kernel = (
            x_main is not None
            and x_main.shape[0] >= _SUBLANE
            and n_elem >= self._min_kernel_elems
        )

        if not use_kernel:
            # Small-input fast path: kernel launch + pipeline priming dominate
            # tiny feature maps; XLA's fused reduction is faster here.
            d = x.astype(jnp.float32) - self.target.astype(jnp.float32)
            self.loss_value = jnp.mean(d * d)
            return x

        partials = _mse_partial_sums(
            x_main, self._t_main,
            tile_rows=self._tile_rows,
            num_slices=self._num_slices,
            core_parallel=self._core_parallel)
        total = jnp.sum(partials)
        if x_tail is not None:
            # <128-element remainder: not worth a kernel launch.
            d = x_tail.astype(jnp.float32) - self._t_tail.astype(jnp.float32)
            total = total + jnp.sum(d * d)

        # nn.MSELoss default 'mean' reduction over the true element count.
        self.loss_value = total / jnp.float32(n_elem)
        return x  # module returns its input unchanged

    __call__ = forward


if __name__ == "__main__":
    key = jax.random.PRNGKey(0)
    k1, k2, k3, k4 = jax.random.split(key, 4)

    def ref_mse(a, b):
        return jnp.mean(jnp.square(a.astype(jnp.float32) - b.astype(jnp.float32)))

    # Case 1: NCHW conv-feature-map shape. Force the Pallas kernel path
    # (min_kernel_elems=0) so the kernel is exercised at this small shape.
    x = jax.random.normal(k1, (2, 4, 16, 16), dtype=jnp.float32)
    target = jax.random.normal(k2, (2, 4, 16, 16), dtype=jnp.float32)
    module = ContentLoss(target, min_kernel_elems=0)
    out = jax.block_until_ready(module(x))
    loss = jax.block_until_ready(module.loss_value)
    ref = ref_mse(x, target)
    assert jnp.allclose(loss, ref, rtol=1e-5, atol=1e-6), (loss, ref)
    assert jnp.array_equal(out, x)  # forward is a pass-through

    # Case 2: ragged element count (exercises the boundary mask + <128 tail),
    # still forced through the kernel.
    x2 = jax.random.normal(k3, (3, 5, 7, 11), dtype=jnp.float32)
    t2 = jax.random.normal(k4, (3, 5, 7, 11), dtype=jnp.float32)
    module2 = ContentLoss(t2, min_kernel_elems=0)
    out2 = jax.block_until_ready(module2(x2))
    loss2 = jax.block_until_ready(module2.loss_value)
    ref2 = ref_mse(x2, t2)
    assert jnp.allclose(loss2, ref2, rtol=1e-5, atol=1e-6), (loss2, ref2)
    assert jnp.array_equal(out2, x2)

    # Case 3: default configuration (small-input fast path, no kernel launch).
    module3 = ContentLoss(target)
    out3 = jax.block_until_ready(module3(x))
    loss3 = jax.block_until_ready(module3.loss_value)
    assert jnp.allclose(loss3, ref, rtol=1e-6, atol=1e-7), (loss3, ref)
    assert jnp.array_equal(out3, x)

    print("KERNEL_OK")
</pallas_src>

<mosaic_0001>
module attributes {stable_mosaic.version = 11 : i64} {
  func.func @kernel(%arg0: i32, %arg1: i32, %arg2: memref<16x128xf32, #tpu.memory_space<vmem>>, %arg3: memref<16x128xf32, #tpu.memory_space<vmem>>, %arg4: memref<1x1xf32, #tpu.memory_space<smem>>, %arg5: memref<16x128xf32, #tpu.memory_space<vmem>>) attributes {dimension_semantics = [#tpu.dimension_semantics<arbitrary>, #tpu.dimension_semantics<arbitrary>], iteration_bounds = array<i64: 1, 1>, scalar_prefetch = 0 : i64, scratch_operands = 1 : i64, tpu.core_type = #tpu.core_type<tc>, window_params = [{transform_indices = @transform_0, window_bounds = array<i64: 16, 128>}, {transform_indices = @transform_1, window_bounds = array<i64: 16, 128>}, {transform_indices = @transform_2, window_bounds = array<i64: 1, 1>}]} {
    %c0_i32 = arith.constant 0 : i32
    %0 = arith.cmpi eq, %arg1, %c0_i32 : i32
    %1 = arith.extui %0 : i1 to i32
    %c0_i32_0 = arith.constant 0 : i32
    %2 = arith.cmpi ne, %1, %c0_i32_0 : i32
    scf.if %2 {
      %cst_10 = arith.constant 0.000000e+00 : f32
      %15 = vector.broadcast %cst_10 : f32 to vector<16x128xf32>
      %c0_11 = arith.constant 0 : index
      %c0_12 = arith.constant 0 : index
      %16 = vector.load %arg5[%c0_11, %c0_12] : memref<16x128xf32, #tpu.memory_space<vmem>>, vector<16x128xf32>
      tpu.vector_store %arg5[%c0_11, %c0_12], %15 {strides = array<i32>} : memref<16x128xf32, #tpu.memory_space<vmem>>, vector<16x128xf32>,
    } else {
    }
    %c0 = arith.constant 0 : index
    %c0_1 = arith.constant 0 : index
    %3 = vector.load %arg2[%c0, %c0_1] : memref<16x128xf32, #tpu.memory_space<vmem>>, vector<16x128xf32>
    %c0_2 = arith.constant 0 : index
    %c0_3 = arith.constant 0 : index
    %4 = vector.load %arg3[%c0_2, %c0_3] : memref<16x128xf32, #tpu.memory_space<vmem>>, vector<16x128xf32>
    %5 = arith.subf %3, %4 : vector<16x128xf32>
    %6 = arith.mulf %5, %5 : vector<16x128xf32>
    %c0_4 = arith.constant 0 : index
    %c0_5 = arith.constant 0 : index
    %7 = vector.load %arg5[%c0_4, %c0_5] : memref<16x128xf32, #tpu.memory_space<vmem>>, vector<16x128xf32>
    %8 = vector.shape_cast %6 : vector<16x128xf32> to vector<1x16x128xf32>
    %cst = arith.constant dense<0.000000e+00> : vector<16x128xf32>
    %9 = vector.multi_reduction <add>, %8, %cst [0] : vector<1x16x128xf32> to vector<16x128xf32>
    %10 = arith.addf %7, %9 : vector<16x128xf32>
    %c0_6 = arith.constant 0 : index
    %c0_7 = arith.constant 0 : index
    %11 = vector.load %arg5[%c0_6, %c0_7] : memref<16x128xf32, #tpu.memory_space<vmem>>, vector<16x128xf32>
    tpu.vector_store %arg5[%c0_6, %c0_7], %10 {strides = array<i32>} : memref<16x128xf32, #tpu.memory_space<vmem>>, vector<16x128xf32>,
    %c0_i32_8 = arith.constant 0 : i32
    %12 = arith.cmpi eq, %arg1, %c0_i32_8 : i32
    %13 = arith.extui %12 : i1 to i32
    %c0_i32_9 = arith.constant 0 : i32
    %14 = arith.cmpi ne, %13, %c0_i32_9 : i32
    scf.if %14 {
      %c0_10 = arith.constant 0 : index
      %c0_11 = arith.constant 0 : index
      %15 = vector.load %arg5[%c0_10, %c0_11] : memref<16x128xf32, #tpu.memory_space<vmem>>, vector<16x128xf32>
      %16 = vector.shape_cast %15 : vector<16x128xf32> to vector<1x16x128xf32>
      %cst_12 = arith.constant dense<0.000000e+00> : vector<1xf32>
      %17 = vector.multi_reduction <add>, %16, %cst_12 [1, 2] : vector<1x16x128xf32> to vector<1xf32>
      %18 = vector.shape_cast %17 : vector<1xf32> to vector<1x1x1xf32>
      %19 = vector.extract %18[0, 0, 0] : f32 from vector<1x1x1xf32>
      %c0_13 = arith.constant 0 : index
      %c0_14 = arith.constant 0 : index
      %20 = memref.load %arg4[%c0_13, %c0_14] : memref<1x1xf32, #tpu.memory_space<smem>>
      memref.store %19, %arg4[%c0_13, %c0_14] : memref<1x1xf32, #tpu.memory_space<smem>>
    } else {
    }
    return
  }
  func.func @transform_0(%arg0: i32, %arg1: i32) -> (i32, i32) {
    %c1_i32 = arith.constant 1 : i32
    %0 = arith.muli %arg0, %c1_i32 : i32
    %1 = arith.addi %0, %arg1 : i32
    %c0_i32 = arith.constant 0 : i32
    %c0_i32_0 = arith.constant 0 : i32
    return %1, %c0_i32 : i32, i32
  }
  func.func @transform_1(%arg0: i32, %arg1: i32) -> (i32, i32) {
    %c1_i32 = arith.constant 1 : i32
    %0 = arith.muli %arg0, %c1_i32 : i32
    %1 = arith.addi %0, %arg1 : i32
    %c0_i32 = arith.constant 0 : i32
    %c0_i32_0 = arith.constant 0 : i32
    return %1, %c0_i32 : i32, i32
  }
  func.func @transform_2(%arg0: i32, %arg1: i32) -> (i32, i32) {
    %c0_i32 = arith.constant 0 : i32
    %c0_i32_0 = arith.constant 0 : i32
    return %arg0, %c0_i32 : i32, i32
  }
}

</mosaic_0001>

<llo_original>
// kernel: tpu_custom_call.1
$region0: #{tpu_custom_call.1}
  #allocation0 [shape = 'u32[]', space=smem, size = 0x4, offset = 0x4, fixed_abs, tag = 'smem constant byte address 0x4 - core index']
  #allocation1 [shape = 'u32[72,128]{1,0:T(1,128)}', space=vmem, size = 0x9000, scoped, tag = 'internal scratch']
  #allocation2 [shape = 'f32[16,128]{1,0:T(8,128)}', space=vmem, size = 0x2000, scoped, tag = 'scratch operand']
  %s0 = inlined_call_operand.hbm [shape: f32[16,128], index: 0, kind: input, shape index: {}]
  %s1 = inlined_call_operand.hbm [shape: f32[16,128], index: 1, kind: input, shape index: {}]
  %s2 = inlined_call_operand.hbm [shape: f32[1,1], index: 2, kind: output, shape index: {}]
  %s3 = sld [smem:[#allocation0]]
  $region34: #{tpu_custom_call.1} parent=0
    _
  %s5 = ssub.s32 1, %s3
  %s6 = scalar_select 0, %s5, %s3
  $region1: #{tpu_custom_call.1} parent=0
    #allocation3 [shape = 'u8[8192]{0}', space=vmem, size = 0x2000, scoped, tag = 'input window, operand 0, single buffered']
    #allocation4 [shape = 's32[1]{0}', space=sflag, size = 0x4, scoped, tag = 'scoped memory for tpu_custom_call.1']
    #allocation5 [shape = 's32[1]{0}', space=sflag, size = 0x4, scoped, tag = 'scoped memory for tpu_custom_call.1']
    #allocation6 [shape = 'u8[8192]{0}', space=vmem, size = 0x2000, scoped, tag = 'input window, operand 1, single buffered']
    #allocation7 [shape = 's32[1]{0}', space=sflag, size = 0x4, scoped, tag = 'scoped memory for tpu_custom_call.1']
    #allocation8 [shape = 'u8[512]{0}', space=smem, size = 0x200, scoped, tag = 'output window, operand 0, single buffered']
    %7 = vsyncpa [#allocation4], 0
    %8 = vsyncpa [#allocation7], 0
    %9 = vsyncpa [#allocation5], 0
    // Predicated region
    $region2: #{tpu_custom_call.1} parent=1 // pred_check
      _
    $region3: #{tpu_custom_call.1} parent=1 // pred_check_branch
      %11 = sbr.rel (0) target = $region5
    $region4: #{tpu_custom_call.1} parent=1 // pred_region
      %s12 = sadd.s32 0, 0
      %s13 = smul.u32 2, %s12
      %15 = vsyncadd [#allocation4], 0
      %s16 = smul.addr %s13, 8
      %s17 = scalar_lea.hbm %s0, %s16
      %s18 = sshll.u32 %s17, 4
      %s19 = int_to_ptr.hbm [resolvable:$true] %s18
      %s20 = sshll.u32 [#allocation3], 4
      %s21 = int_to_ptr.vmem [resolvable:$true] %s20
      %26 = dma.hbm_to_vmem [thread:$0]  %s19, 256, %s21, [#allocation4], 128, 128, 8
    $region5: #{tpu_custom_call.1} parent=1 // pred_fallthru
      _
    // Predicated region
    $region6: #{tpu_custom_call.1} parent=1 // pred_check
      _
    $region7: #{tpu_custom_call.1} parent=1 // pred_check_branch
      %28 = sbr.rel (0) target = $region9
    $region8: #{tpu_custom_call.1} parent=1 // pred_region
      %s29 = sadd.s32 0, 0
      %s30 = smul.u32 2, %s29
      %32 = vsyncadd [#allocation7], 0
      %s33 = smul.addr %s30, 8
      %s34 = scalar_lea.hbm %s1, %s33
      %s35 = sshll.u32 %s34, 4
      %s36 = int_to_ptr.hbm [resolvable:$true] %s35
      %s37 = sshll.u32 [#allocation6], 4
      %s38 = int_to_ptr.vmem [resolvable:$true] %s37
      %43 = dma.hbm_to_vmem [thread:$0]  %s36, 256, %s38, [#allocation7], 128, 128, 8
    $region9: #{tpu_custom_call.1} parent=1 // pred_fallthru
      _
    // Predicated region
    $region10: #{tpu_custom_call.1} parent=1 // pred_check
      _
    $region11: #{tpu_custom_call.1} parent=1 // pred_check_branch
      %45 = sbr.rel (0) target = $region13
    $region12: #{tpu_custom_call.1} parent=1 // pred_region
      %47 = dma.done [#allocation4], 256
    $region13: #{tpu_custom_call.1} parent=1 // pred_fallthru
      _
    // Predicated region
    $region14: #{tpu_custom_call.1} parent=1 // pred_check
      _
    $region15: #{tpu_custom_call.1} parent=1 // pred_check_branch
      %49 = sbr.rel (0) target = $region17
    $region16: #{tpu_custom_call.1} parent=1 // pred_region
      %51 = dma.done [#allocation7], 256
    $region17: #{tpu_custom_call.1} parent=1 // pred_fallthru
      _
    %s52 = sadd.s32 0, 0
    %s53 = smul.u32 2, %s52
    %s54 = sadd.s32 0, 0
    %s55 = smul.u32 2, %s54
    %p56 = scmp.eq.s32.totalorder 0, 0
    // Predicated region
    $region18: #{tpu_custom_call.1} parent=1 // pred_check
      %p57 = pneg %p56
    $region19: #{tpu_custom_call.1} parent=1 // pred_check_branch
      %59 = sbr.rel (%p57) target = $region21
    $region20: #{tpu_custom_call.1} parent=1 // pred_region
      %60 = vst [vmem:[#allocation2] sm:$0xff] 0.0
      %61 = vst [vmem:[#allocation2 + $0x8] sm:$0xff] 0.0
    $region21: #{tpu_custom_call.1} parent=1 // pred_fallthru
      _
    %v62 = vld [vmem:[#allocation3] sm:$0xff]
    %v63 = vld [vmem:[#allocation3 + $0x8] sm:$0xff]
    %v64 = vld [vmem:[#allocation6] sm:$0xff]
    %v65 = vld [vmem:[#allocation6 + $0x8] sm:$0xff]
    %v66 = vsub.f32 %v62, %v64
    %v67 = vsub.f32 %v63, %v65
    %v68 = vmul.f32 %v66, %v66
    %v69 = vmul.f32 %v67, %v67
    %v70 = vld [vmem:[#allocation2] sm:$0xff]
    %v71 = vld [vmem:[#allocation2 + $0x8] sm:$0xff]
    %v72 = vadd.f32 %v68, 0.0
    %v73 = vadd.f32 %v69, 0.0
    %v74 = vadd.f32 %v70, %v72
    %v75 = vadd.f32 %v71, %v73
    %76 = vst [vmem:[#allocation2] sm:$0xff] %v74
    %77 = vst [vmem:[#allocation2 + $0x8] sm:$0xff] %v75
    // Predicated region
    $region22: #{tpu_custom_call.1} parent=1 // pred_check
      %p78 = pneg %p56
    $region23: #{tpu_custom_call.1} parent=1 // pred_check_branch
      %80 = sbr.rel (%p78) target = $region25
    $region24: #{tpu_custom_call.1} parent=1 // pred_region
      %v81 = vld [vmem:[#allocation2] sm:$0xff]
      %v82 = vld [vmem:[#allocation2 + $0x8] sm:$0xff]
      %v83 = vadd.f32 %v81, %v82
      %84 = vadd.xlane.f32.xlu0 %v83
      %v85 = vpop.xlane.xlu0 %84
      %v86 = vrot.slane %v85, 4
      %v87 = vadd.f32 %v85, %v86
      %v88 = vrot.slane %v87, 2
      %v89 = vadd.f32 %v87, %v88
      %v90 = vrot.slane %v89, 1
      %v91 = vadd.f32 %v89, %v90
      %s92 = vtos %v91
      %s93 = scalar_lea.smem [#allocation8], 0
      %94 = sst [smem:[%s93]] %s92
    $region25: #{tpu_custom_call.1} parent=1 // pred_fallthru
      _
    // Predicated region
    $region26: #{tpu_custom_call.1} parent=1 // pred_check
      _
    $region27: #{tpu_custom_call.1} parent=1 // pred_check_branch
      %96 = sbr.rel (0) target = $region29
    $region28: #{tpu_custom_call.1} parent=1 // pred_region
      %98 = vsyncadd [#allocation5], 0
      %s100 = sshll.u32 %s2, 4
      %s101 = int_to_ptr.hbm [resolvable:$true] %s100
      %103 = dma.smem_to_hbm [#allocation8], 16, %s101, [#allocation5]
    $region29: #{tpu_custom_call.1} parent=1 // pred_fallthru
      _
    // Predicated region
    $region30: #{tpu_custom_call.1} parent=1 // pred_check
      _
    $region31: #{tpu_custom_call.1} parent=1 // pred_check_branch
      %105 = sbr.rel (0) target = $region33
    $region32: #{tpu_custom_call.1} parent=1 // pred_region
      %107 = dma.done [#allocation5], 16
    $region33: #{tpu_custom_call.1} parent=1 // pred_fallthru
      _
    %108 = sfence
    %109 = vsyncpa [#allocation4], 1
    %110 = vsyncpa [#allocation7], 1
    %111 = vsyncpa [#allocation5], 1

</llo_original>
